<compile_context>
chip_gen: v6e
topology: v6e:2x2x1
jax: 0.10.0
libtpu: 0.0.40
codegen_flags: <defaults>
</compile_context>

<pallas_src>
import functools

import jax
import jax.numpy as jnp
from jax import lax
from jax.experimental import pallas as pl
from jax.experimental.pallas import tpu as pltpu


def _finalfc_kernel(x_ref, w_ref, b_ref, o_ref, acc_ref, *, hw_total, t_hw, inv_hw):
    """One (batch-tile, HW-tile) grid step.

    x_ref  : (tb, t_hw, C)   channels-last input tile
    w_ref  : (C, OUT_pad)    transposed Linear weight (constant block)
    b_ref  : (1, OUT_pad)    bias (constant block)
    o_ref  : (tb, OUT_pad)   output tile (resident across the HW axis)
    acc_ref: (tb, C) fp32    pooled-sum accumulator (scratch)
    """
    j = pl.program_id(1)

    @pl.when(j == 0)
    def _init():
        acc_ref[...] = jnp.zeros_like(acc_ref)

    x = x_ref[...]  # keep native dtype; no full-block upcast
    if hw_total % t_hw != 0:
        # Mask the ragged remainder tile so padded pixels don't contaminate the mean.
        pix = j * t_hw + lax.broadcasted_iota(jnp.int32, x.shape, dimension=1)
        x = jnp.where(pix < hw_total, x, jnp.zeros_like(x))

    # Sublane (HW-axis) reduction, accumulated in fp32.
    acc_ref[...] += jnp.sum(x, axis=1, dtype=jnp.float32)

    @pl.when(j == pl.num_programs(1) - 1)
    def _finalize():
        pooled = acc_ref[...] * inv_hw                       # (tb, C) global average, fp32
        out = jnp.dot(pooled, w_ref[...],
                      preferred_element_type=jnp.float32)    # (tb, OUT_pad) on the MXU
        out = out + b_ref[...].astype(jnp.float32)
        o_ref[...] = out.astype(o_ref.dtype)


def _round_up(n, m):
    return (n + m - 1) // m * m


def final_fc(x_nchw, weight, bias=None, *, x_tile_bytes=4 * 1024 * 1024):
    """AdaptiveAvgPool2d(1) -> Flatten -> Linear fused in one Pallas kernel.

    x_nchw: (B, C, H, W); weight: (OUT, C) as in nn.Linear; bias: (OUT,) or None.
    Returns (B, OUT) in the input dtype.
    """
    B, C, H, W = x_nchw.shape
    OUT = weight.shape[0]
    HW = H * W

    # ---- layout plumbing only (no compute hoisting): channels-last ------------
    x_bpc = jnp.transpose(x_nchw.reshape(B, C, HW), (0, 2, 1))    # (B, HW, C)

    # Pad OUT to a lane-dense multiple of 128 so the final store is unmasked.
    OUT_pad = _round_up(OUT, 128)
    w_t = jnp.transpose(weight)                                   # (C, OUT)
    if OUT_pad != OUT:
        w_t = jnp.pad(w_t, ((0, 0), (0, OUT_pad - OUT)))
    if bias is None:
        b2d = jnp.zeros((1, OUT_pad), dtype=weight.dtype)
    else:
        b2d = jnp.pad(bias, (0, OUT_pad - OUT)).reshape(1, OUT_pad)

    # ---- tile selection --------------------------------------------------------
    itemsize = x_nchw.dtype.itemsize
    if B <= 256:
        tb = B                                   # whole (small) batch per tile
    else:
        tb = next((c for c in (256, 128, 64, 32, 16, 8) if B % c == 0), B)

    if HW <= 8 or tb * HW * C * itemsize <= x_tile_bytes:
        t_hw = HW                                # whole spatial extent fits one tile
    else:
        t_hw = max(8, (x_tile_bytes // (tb * C * itemsize)) // 8 * 8)
        t_hw = min(t_hw, (HW // 8) * 8)          # keep the (…,8,128) tiling constraint

    n_b = pl.cdiv(B, tb)
    n_hw = pl.cdiv(HW, t_hw)

    # ---- VMEM budget: each pipelined input/output block is double-buffered ----
    x_blk = tb * t_hw * C * itemsize
    w_blk = C * OUT_pad * w_t.dtype.itemsize
    b_blk = OUT_pad * b2d.dtype.itemsize
    o_blk = tb * OUT_pad * itemsize
    acc_blk = tb * C * 4
    vmem_limit = 2 * x_blk + 2 * (w_blk + b_blk + o_blk) + acc_blk + (4 << 20)
    vmem_limit = int(min(max(vmem_limit, 16 << 20), 64 << 20))    # safe on v5e/v6e/v7x

    kernel = functools.partial(
        _finalfc_kernel, hw_total=HW, t_hw=t_hw, inv_hw=1.0 / float(HW))

    out = pl.pallas_call(
        kernel,
        out_shape=jax.ShapeDtypeStruct((B, OUT_pad), x_nchw.dtype),
        grid_spec=pltpu.PrefetchScalarGridSpec(
            num_scalar_prefetch=0,
            grid=(n_b, n_hw),                     # reduction (HW) axis last
            in_specs=[
                pl.BlockSpec((tb, t_hw, C), lambda i, j: (i, j, 0)),
                pl.BlockSpec((C, OUT_pad), lambda i, j: (0, 0)),
                pl.BlockSpec((1, OUT_pad), lambda i, j: (0, 0)),
            ],
            out_specs=pl.BlockSpec((tb, OUT_pad), lambda i, j: (i, 0)),
            scratch_shapes=[pltpu.VMEM((tb, C), jnp.float32)],
        ),
        compiler_params=pltpu.CompilerParams(
            dimension_semantics=("parallel", "arbitrary"),
            vmem_limit_bytes=vmem_limit,
        ),
    )(x_bpc, w_t, b2d)

    return out[:, :OUT] if OUT_pad != OUT else out


if __name__ == "__main__":
    # Small shapes consistent with the module: last conv channels -> global pool -> FC.
    B, C, H, W = 2, 4, 16, 16
    OUT = 32

    key = jax.random.PRNGKey(0)
    kx, kw, kb = jax.random.split(key, 3)

    x = jax.random.normal(kx, (B, C, H, W), dtype=jnp.float32)
    # Deterministic parameter init (shapes match nn.Linear(in_features=C, out_features=OUT)).
    bound = 1.0 / (C ** 0.5)
    weight = jax.random.uniform(kw, (OUT, C), minval=-bound, maxval=bound, dtype=jnp.float32)
    bias = jax.random.uniform(kb, (OUT,), minval=-bound, maxval=bound, dtype=jnp.float32)

    out = final_fc(x, weight, bias)
    out = jax.block_until_ready(out)

    # Pure-JAX reference of the same semantics.
    ref = jnp.mean(x, axis=(2, 3)) @ weight.T + bias
    assert out.shape == (B, OUT)
    assert jnp.allclose(out, ref, atol=1e-5, rtol=1e-5)

    print("KERNEL_OK")
</pallas_src>

<mosaic_0001>
module attributes {stable_mosaic.version = 11 : i64} {
  func.func @_finalfc_kernel(%arg0: i32, %arg1: i32, %arg2: memref<2x256x4xf32, #tpu.memory_space<vmem>>, %arg3: memref<4x128xf32, #tpu.memory_space<vmem>>, %arg4: memref<1x128xf32, #tpu.memory_space<vmem>>, %arg5: memref<2x128xf32, #tpu.memory_space<vmem>>, %arg6: memref<2x4xf32, #tpu.memory_space<vmem>>) attributes {dimension_semantics = [#tpu.dimension_semantics<parallel>, #tpu.dimension_semantics<arbitrary>], iteration_bounds = array<i64: 1, 1>, scalar_prefetch = 0 : i64, scratch_operands = 1 : i64, tpu.core_type = #tpu.core_type<tc>, window_params = [{transform_indices = @transform_0, window_bounds = array<i64: 2, 256, 4>}, {pipeline_mode = #tpu.pipeline_mode<synchronous>, transform_indices = @transform_1, window_bounds = array<i64: 4, 128>}, {pipeline_mode = #tpu.pipeline_mode<synchronous>, transform_indices = @transform_2, window_bounds = array<i64: 1, 128>}, {transform_indices = @transform_3, window_bounds = array<i64: 2, 128>}]} {
    %c0_i32 = arith.constant 0 : i32
    %0 = arith.cmpi eq, %arg1, %c0_i32 : i32
    %1 = arith.extui %0 : i1 to i32
    %c0_i32_0 = arith.constant 0 : i32
    %2 = arith.cmpi ne, %1, %c0_i32_0 : i32
    scf.if %2 {
      %cst_9 = arith.constant 0.000000e+00 : f32
      %11 = vector.broadcast %cst_9 : f32 to vector<2x4xf32>
      %c0_10 = arith.constant 0 : index
      %c0_11 = arith.constant 0 : index
      %12 = vector.load %arg6[%c0_10, %c0_11] : memref<2x4xf32, #tpu.memory_space<vmem>>, vector<2x4xf32>
      tpu.vector_store %arg6[%c0_10, %c0_11], %11 {strides = array<i32>} : memref<2x4xf32, #tpu.memory_space<vmem>>, vector<2x4xf32>,
    } else {
    }
    %c0 = arith.constant 0 : index
    %c0_1 = arith.constant 0 : index
    %c0_2 = arith.constant 0 : index
    %3 = vector.load %arg2[%c0, %c0_1, %c0_2] : memref<2x256x4xf32, #tpu.memory_space<vmem>>, vector<2x256x4xf32>
    %c0_3 = arith.constant 0 : index
    %c0_4 = arith.constant 0 : index
    %4 = vector.load %arg6[%c0_3, %c0_4] : memref<2x4xf32, #tpu.memory_space<vmem>>, vector<2x4xf32>
    %cst = arith.constant dense<0.000000e+00> : vector<2x4xf32>
    %5 = vector.multi_reduction <add>, %3, %cst [1] : vector<2x256x4xf32> to vector<2x4xf32>
    %6 = arith.addf %4, %5 : vector<2x4xf32>
    %c0_5 = arith.constant 0 : index
    %c0_6 = arith.constant 0 : index
    %7 = vector.load %arg6[%c0_5, %c0_6] : memref<2x4xf32, #tpu.memory_space<vmem>>, vector<2x4xf32>
    tpu.vector_store %arg6[%c0_5, %c0_6], %6 {strides = array<i32>} : memref<2x4xf32, #tpu.memory_space<vmem>>, vector<2x4xf32>,
    %c0_i32_7 = arith.constant 0 : i32
    %8 = arith.cmpi eq, %arg1, %c0_i32_7 : i32
    %9 = arith.extui %8 : i1 to i32
    %c0_i32_8 = arith.constant 0 : i32
    %10 = arith.cmpi ne, %9, %c0_i32_8 : i32
    scf.if %10 {
      %c0_9 = arith.constant 0 : index
      %c0_10 = arith.constant 0 : index
      %11 = vector.load %arg6[%c0_9, %c0_10] : memref<2x4xf32, #tpu.memory_space<vmem>>, vector<2x4xf32>
      %cst_11 = arith.constant 3.906250e-03 : f32
      %12 = vector.broadcast %cst_11 : f32 to vector<2x4xf32>
      %13 = arith.mulf %11, %12 : vector<2x4xf32>
      %c0_12 = arith.constant 0 : index
      %c0_13 = arith.constant 0 : index
      %14 = vector.load %arg3[%c0_12, %c0_13] : memref<4x128xf32, #tpu.memory_space<vmem>>, vector<4x128xf32>
      %cst_14 = arith.constant dense<0.000000e+00> : vector<2x128xf32>
      %15 = tpu.matmul %13, %14, %cst_14 {dimension_numbers = #tpu.dot_dimension_numbers<[1], [0], [0], [1], [0, 0, 1, 1], [], []>} : vector<2x4xf32>, vector<4x128xf32>, vector<2x128xf32> -> vector<2x128xf32>
      %c0_15 = arith.constant 0 : index
      %c0_16 = arith.constant 0 : index
      %16 = vector.load %arg4[%c0_15, %c0_16] : memref<1x128xf32, #tpu.memory_space<vmem>>, vector<1x128xf32>
      %17 = vector.broadcast %16 : vector<1x128xf32> to vector<2x128xf32>
      %18 = arith.addf %15, %17 : vector<2x128xf32>
      %c0_17 = arith.constant 0 : index
      %c0_18 = arith.constant 0 : index
      %19 = vector.load %arg5[%c0_17, %c0_18] : memref<2x128xf32, #tpu.memory_space<vmem>>, vector<2x128xf32>
      tpu.vector_store %arg5[%c0_17, %c0_18], %18 {strides = array<i32>} : memref<2x128xf32, #tpu.memory_space<vmem>>, vector<2x128xf32>,
    } else {
    }
    return
  }
  func.func @transform_0(%arg0: i32, %arg1: i32) -> (i32, i32, i32) {
    %c0_i32 = arith.constant 0 : i32
    %c0_i32_0 = arith.constant 0 : i32
    return %arg0, %arg1, %c0_i32 : i32, i32, i32
  }
  func.func @transform_1(%arg0: i32, %arg1: i32) -> (i32, i32) {
    %c0_i32 = arith.constant 0 : i32
    %c0_i32_0 = arith.constant 0 : i32
    %c0_i32_1 = arith.constant 0 : i32
    return %c0_i32, %c0_i32_0 : i32, i32
  }
  func.func @transform_2(%arg0: i32, %arg1: i32) -> (i32, i32) {
    %c0_i32 = arith.constant 0 : i32
    %c0_i32_0 = arith.constant 0 : i32
    %c0_i32_1 = arith.constant 0 : i32
    return %c0_i32, %c0_i32_0 : i32, i32
  }
  func.func @transform_3(%arg0: i32, %arg1: i32) -> (i32, i32) {
    %c0_i32 = arith.constant 0 : i32
    %c0_i32_0 = arith.constant 0 : i32
    return %arg0, %c0_i32 : i32, i32
  }
}

</mosaic_0001>

<llo_original>
// kernel: tpu_custom_call.1
$region0: #{tpu_custom_call.1}
  #allocation0 [shape = 'u32[]', space=smem, size = 0x4, offset = 0x4, fixed_abs, tag = 'smem constant byte address 0x4 - core index']
  #allocation1 [shape = 'u32[144,128]{1,0:T(1,128)}', space=vmem, size = 0x12000, scoped, tag = 'internal scratch']
  #allocation2 [shape = 'f32[2,4]{1,0:T(2,128)}', space=vmem, size = 0x400, scoped, tag = 'scratch operand']
  %s0 = inlined_call_operand.vmem [shape: f32[2,256,4], index: 0, kind: input, shape index: {}]
  %s1 = inlined_call_operand.vmem [shape: f32[4,128], index: 1, kind: input, shape index: {}]
  %s2 = inlined_call_operand.vmem [shape: f32[1,128], index: 2, kind: input, shape index: {}]
  %s3 = inlined_call_operand.hbm [shape: f32[2,128], index: 3, kind: output, shape index: {}]
  %s4 = sld [smem:[#allocation0]]
  $region30: #{tpu_custom_call.1} parent=0
    _
  %s6 = ssub.s32 1, %s4
  %s7 = scalar_select 0, %s6, %s4
  $region1: #{tpu_custom_call.1} parent=0
    #allocation3 [shape = 'u8[1024]{0}', space=vmem, size = 0x400, scoped, tag = 'output window, operand 0, single buffered']
    #allocation4 [shape = 's32[1]{0}', space=sflag, size = 0x4, scoped, tag = 'scoped memory for tpu_custom_call.1']
    %8 = vsyncpa [#allocation4], 0
    // Predicated region
    $region2: #{tpu_custom_call.1} parent=1 // pred_check
      _
    $region3: #{tpu_custom_call.1} parent=1 // pred_check_branch
      %10 = sbr.rel (0) target = $region5
    $region4: #{tpu_custom_call.1} parent=1 // pred_region
      _
    $region5: #{tpu_custom_call.1} parent=1 // pred_fallthru
      _
    // Predicated region
    $region6: #{tpu_custom_call.1} parent=1 // pred_check
      _
    $region7: #{tpu_custom_call.1} parent=1 // pred_check_branch
      %12 = sbr.rel (0) target = $region9
    $region8: #{tpu_custom_call.1} parent=1 // pred_region
      _
    $region9: #{tpu_custom_call.1} parent=1 // pred_fallthru
      _
    // Predicated region
    $region10: #{tpu_custom_call.1} parent=1 // pred_check
      _
    $region11: #{tpu_custom_call.1} parent=1 // pred_check_branch
      %14 = sbr.rel (0) target = $region13
    $region12: #{tpu_custom_call.1} parent=1 // pred_region
      _
    $region13: #{tpu_custom_call.1} parent=1 // pred_fallthru
      _
    %p15 = scmp.eq.s32.totalorder 0, 0
    // Predicated region
    $region14: #{tpu_custom_call.1} parent=1 // pred_check
      %p16 = pneg %p15
    $region15: #{tpu_custom_call.1} parent=1 // pred_check_branch
      %18 = sbr.rel (%p16) target = $region17
    $region16: #{tpu_custom_call.1} parent=1 // pred_region
      %vm19 = vcmask 25600
      %20 = vst.msk [vmem:[#allocation2] sm:$0x3] %vm19, 0.0
    $region17: #{tpu_custom_call.1} parent=1 // pred_fallthru
      _
    %v21 = vld [vmem:[%s0] sm:$0xff]
    %v22 = vld [vmem:[%s0 + $0x8] sm:$0xff]
    %v23 = vld [vmem:[%s0 + $0x10] sm:$0xff]
    %v24 = vld [vmem:[%s0 + $0x18] sm:$0xff]
    %v25 = vld [vmem:[%s0 + $0x20] sm:$0xff]
    %v26 = vld [vmem:[%s0 + $0x28] sm:$0xff]
    %v27 = vld [vmem:[%s0 + $0x30] sm:$0xff]
    %v28 = vld [vmem:[%s0 + $0x38] sm:$0xff]
    %v29 = vld [vmem:[%s0 + $0x40] sm:$0xff]
    %v30 = vld [vmem:[%s0 + $0x48] sm:$0xff]
    %v31 = vld [vmem:[%s0 + $0x50] sm:$0xff]
    %v32 = vld [vmem:[%s0 + $0x58] sm:$0xff]
    %v33 = vld [vmem:[%s0 + $0x60] sm:$0xff]
    %v34 = vld [vmem:[%s0 + $0x68] sm:$0xff]
    %v35 = vld [vmem:[%s0 + $0x70] sm:$0xff]
    %v36 = vld [vmem:[%s0 + $0x78] sm:$0xff]
    %v37 = vld [vmem:[%s0 + $0x80] sm:$0xff]
    %v38 = vld [vmem:[%s0 + $0x88] sm:$0xff]
    %v39 = vld [vmem:[%s0 + $0x90] sm:$0xff]
    %v40 = vld [vmem:[%s0 + $0x98] sm:$0xff]
    %v41 = vld [vmem:[%s0 + $0xa0] sm:$0xff]
    %v42 = vld [vmem:[%s0 + $0xa8] sm:$0xff]
    %v43 = vld [vmem:[%s0 + $0xb0] sm:$0xff]
    %v44 = vld [vmem:[%s0 + $0xb8] sm:$0xff]
    %v45 = vld [vmem:[%s0 + $0xc0] sm:$0xff]
    %v46 = vld [vmem:[%s0 + $0xc8] sm:$0xff]
    %v47 = vld [vmem:[%s0 + $0xd0] sm:$0xff]
    %v48 = vld [vmem:[%s0 + $0xd8] sm:$0xff]
    %v49 = vld [vmem:[%s0 + $0xe0] sm:$0xff]
    %v50 = vld [vmem:[%s0 + $0xe8] sm:$0xff]
    %v51 = vld [vmem:[%s0 + $0xf0] sm:$0xff]
    %v52 = vld [vmem:[%s0 + $0xf8] sm:$0xff]
    %v53 = vld [vmem:[%s0 + $0x100] sm:$0xff]
    %v54 = vld [vmem:[%s0 + $0x108] sm:$0xff]
    %v55 = vld [vmem:[%s0 + $0x110] sm:$0xff]
    %v56 = vld [vmem:[%s0 + $0x118] sm:$0xff]
    %v57 = vld [vmem:[%s0 + $0x120] sm:$0xff]
    %v58 = vld [vmem:[%s0 + $0x128] sm:$0xff]
    %v59 = vld [vmem:[%s0 + $0x130] sm:$0xff]
    %v60 = vld [vmem:[%s0 + $0x138] sm:$0xff]
    %v61 = vld [vmem:[%s0 + $0x140] sm:$0xff]
    %v62 = vld [vmem:[%s0 + $0x148] sm:$0xff]
    %v63 = vld [vmem:[%s0 + $0x150] sm:$0xff]
    %v64 = vld [vmem:[%s0 + $0x158] sm:$0xff]
    %v65 = vld [vmem:[%s0 + $0x160] sm:$0xff]
    %v66 = vld [vmem:[%s0 + $0x168] sm:$0xff]
    %v67 = vld [vmem:[%s0 + $0x170] sm:$0xff]
    %v68 = vld [vmem:[%s0 + $0x178] sm:$0xff]
    %v69 = vld [vmem:[%s0 + $0x180] sm:$0xff]
    %v70 = vld [vmem:[%s0 + $0x188] sm:$0xff]
    %v71 = vld [vmem:[%s0 + $0x190] sm:$0xff]
    %v72 = vld [vmem:[%s0 + $0x198] sm:$0xff]
    %v73 = vld [vmem:[%s0 + $0x1a0] sm:$0xff]
    %v74 = vld [vmem:[%s0 + $0x1a8] sm:$0xff]
    %v75 = vld [vmem:[%s0 + $0x1b0] sm:$0xff]
    %v76 = vld [vmem:[%s0 + $0x1b8] sm:$0xff]
    %v77 = vld [vmem:[%s0 + $0x1c0] sm:$0xff]
    %v78 = vld [vmem:[%s0 + $0x1c8] sm:$0xff]
    %v79 = vld [vmem:[%s0 + $0x1d0] sm:$0xff]
    %v80 = vld [vmem:[%s0 + $0x1d8] sm:$0xff]
    %v81 = vld [vmem:[%s0 + $0x1e0] sm:$0xff]
    %v82 = vld [vmem:[%s0 + $0x1e8] sm:$0xff]
    %v83 = vld [vmem:[%s0 + $0x1f0] sm:$0xff]
    %v84 = vld [vmem:[%s0 + $0x1f8] sm:$0xff]
    %v85 = vld [vmem:[#allocation2] sm:$0x3]
    %vm86 = vcmask 31744
    %v87 = vsel %vm86, %v21, 0.0
    %v88 = vsel %vm86, %v22, 0.0
    %v89 = vadd.f32 %v87, %v88
    %v90 = vsel %vm86, %v23, 0.0
    %v91 = vadd.f32 %v89, %v90
    %v92 = vsel %vm86, %v24, 0.0
    %v93 = vadd.f32 %v91, %v92
    %v94 = vsel %vm86, %v25, 0.0
    %v95 = vadd.f32 %v93, %v94
    %v96 = vsel %vm86, %v26, 0.0
    %v97 = vadd.f32 %v95, %v96
    %v98 = vsel %vm86, %v27, 0.0
    %v99 = vadd.f32 %v97, %v98
    %v100 = vsel %vm86, %v28, 0.0
    %v101 = vadd.f32 %v99, %v100
    %v102 = vsel %vm86, %v29, 0.0
    %v103 = vadd.f32 %v101, %v102
    %v104 = vsel %vm86, %v30, 0.0
    %v105 = vadd.f32 %v103, %v104
    %v106 = vsel %vm86, %v31, 0.0
    %v107 = vadd.f32 %v105, %v106
    %v108 = vsel %vm86, %v32, 0.0
    %v109 = vadd.f32 %v107, %v108
    %v110 = vsel %vm86, %v33, 0.0
    %v111 = vadd.f32 %v109, %v110
    %v112 = vsel %vm86, %v34, 0.0
    %v113 = vadd.f32 %v111, %v112
    %v114 = vsel %vm86, %v35, 0.0
    %v115 = vadd.f32 %v113, %v114
    %v116 = vsel %vm86, %v36, 0.0
    %v117 = vadd.f32 %v115, %v116
    %v118 = vsel %vm86, %v37, 0.0
    %v119 = vadd.f32 %v117, %v118
    %v120 = vsel %vm86, %v38, 0.0
    %v121 = vadd.f32 %v119, %v120
    %v122 = vsel %vm86, %v39, 0.0
    %v123 = vadd.f32 %v121, %v122
    %v124 = vsel %vm86, %v40, 0.0
    %v125 = vadd.f32 %v123, %v124
    %v126 = vsel %vm86, %v41, 0.0
    %v127 = vadd.f32 %v125, %v126
    %v128 = vsel %vm86, %v42, 0.0
    %v129 = vadd.f32 %v127, %v128
    %v130 = vsel %vm86, %v43, 0.0
    %v131 = vadd.f32 %v129, %v130
    %v132 = vsel %vm86, %v44, 0.0
    %v133 = vadd.f32 %v131, %v132
    %v134 = vsel %vm86, %v45, 0.0
    %v135 = vadd.f32 %v133, %v134
    %v136 = vsel %vm86, %v46, 0.0
    %v137 = vadd.f32 %v135, %v136
    %v138 = vsel %vm86, %v47, 0.0
    %v139 = vadd.f32 %v137, %v138
    %v140 = vsel %vm86, %v48, 0.0
    %v141 = vadd.f32 %v139, %v140
    %v142 = vsel %vm86, %v49, 0.0
    %v143 = vadd.f32 %v141, %v142
    %v144 = vsel %vm86, %v50, 0.0
    %v145 = vadd.f32 %v143, %v144
    %v146 = vsel %vm86, %v51, 0.0
    %v147 = vadd.f32 %v145, %v146
    %v148 = vsel %vm86, %v52, 0.0
    %v149 = vadd.f32 %v147, %v148
    %v150 = vrot.slane %v149, 4
    %v151 = vadd.f32 %v149, %v150
    %v152 = vrot.slane %v151, 2
    %v153 = vadd.f32 %v151, %v152
    %v154 = vrot.slane %v153, 1
    %v155 = vadd.f32 %v153, %v154
    %v156 = vsel %vm86, %v53, 0.0
    %v157 = vsel %vm86, %v54, 0.0
    %v158 = vadd.f32 %v156, %v157
    %v159 = vsel %vm86, %v55, 0.0
    %v160 = vadd.f32 %v158, %v159
    %v161 = vsel %vm86, %v56, 0.0
    %v162 = vadd.f32 %v160, %v161
    %v163 = vsel %vm86, %v57, 0.0
    %v164 = vadd.f32 %v162, %v163
    %v165 = vsel %vm86, %v58, 0.0
    %v166 = vadd.f32 %v164, %v165
    %v167 = vsel %vm86, %v59, 0.0
    %v168 = vadd.f32 %v166, %v167
    %v169 = vsel %vm86, %v60, 0.0
    %v170 = vadd.f32 %v168, %v169
    %v171 = vsel %vm86, %v61, 0.0
    %v172 = vadd.f32 %v170, %v171
    %v173 = vsel %vm86, %v62, 0.0
    %v174 = vadd.f32 %v172, %v173
    %v175 = vsel %vm86, %v63, 0.0
    %v176 = vadd.f32 %v174, %v175
    %v177 = vsel %vm86, %v64, 0.0
    %v178 = vadd.f32 %v176, %v177
    %v179 = vsel %vm86, %v65, 0.0
    %v180 = vadd.f32 %v178, %v179
    %v181 = vsel %vm86, %v66, 0.0
    %v182 = vadd.f32 %v180, %v181
    %v183 = vsel %vm86, %v67, 0.0
    %v184 = vadd.f32 %v182, %v183
    %v185 = vsel %vm86, %v68, 0.0
    %v186 = vadd.f32 %v184, %v185
    %v187 = vsel %vm86, %v69, 0.0
    %v188 = vadd.f32 %v186, %v187
    %v189 = vsel %vm86, %v70, 0.0
    %v190 = vadd.f32 %v188, %v189
    %v191 = vsel %vm86, %v71, 0.0
    %v192 = vadd.f32 %v190, %v191
    %v193 = vsel %vm86, %v72, 0.0
    %v194 = vadd.f32 %v192, %v193
    %v195 = vsel %vm86, %v73, 0.0
    %v196 = vadd.f32 %v194, %v195
    %v197 = vsel %vm86, %v74, 0.0
    %v198 = vadd.f32 %v196, %v197
    %v199 = vsel %vm86, %v75, 0.0
    %v200 = vadd.f32 %v198, %v199
    %v201 = vsel %vm86, %v76, 0.0
    %v202 = vadd.f32 %v200, %v201
    %v203 = vsel %vm86, %v77, 0.0
    %v204 = vadd.f32 %v202, %v203
    %v205 = vsel %vm86, %v78, 0.0
    %v206 = vadd.f32 %v204, %v205
    %v207 = vsel %vm86, %v79, 0.0
    %v208 = vadd.f32 %v206, %v207
    %v209 = vsel %vm86, %v80, 0.0
    %v210 = vadd.f32 %v208, %v209
    %v211 = vsel %vm86, %v81, 0.0
    %v212 = vadd.f32 %v210, %v211
    %v213 = vsel %vm86, %v82, 0.0
    %v214 = vadd.f32 %v212, %v213
    %v215 = vsel %vm86, %v83, 0.0
    %v216 = vadd.f32 %v214, %v215
    %v217 = vsel %vm86, %v84, 0.0
    %v218 = vadd.f32 %v216, %v217
    %v219 = vrot.slane %v218, 4
    %v220 = vadd.f32 %v218, %v219
    %v221 = vrot.slane %v220, 2
    %v222 = vadd.f32 %v220, %v221
    %v223 = vrot.slane %v222, 1
    %v224 = vadd.f32 %v222, %v223
    %vm227 = vcmask 1041409
    %v228 = vsel %vm227, %v224, %v155
    %v230 = vadd.f32 %v85, %v228
    %vm231 = vcmask 25600
    %232 = vst.msk [vmem:[#allocation2] sm:$0x3] %vm231, %v230
    // Predicated region
    $region18: #{tpu_custom_call.1} parent=1 // pred_check
      %p233 = pneg %p15
    $region19: #{tpu_custom_call.1} parent=1 // pred_check_branch
      %235 = sbr.rel (%p233) target = $region21
    $region20: #{tpu_custom_call.1} parent=1 // pred_region
      %v236 = vld [vmem:[#allocation2] sm:$0x3]
      %v237 = vmul.f32 %v236, 0.00390625
      %v238 = vld [vmem:[%s1] sm:$0xf]
      %v239 = vld [vmem:[%s2] sm:$0x1]
      %v241 = vlaneseq
      %v242 = vshrl.u32 %v241, 7
      %v243 = vsub.s32 0, %v242
      %v244 = vrot.slane %v239, %v243
      %v247 = vsel %vm86, %v237, 0
      %vm249 = vcmask 1043456
      %v251 = vsel %vm249, %v238, 0
      %253 = vmatprep.subr.mxu0 0.0
      %254 = vmatpush1.msra.mxu0 0.0
      %255 = vmatprep.subr.mxu0 0.0
      %256 = vmatpush1.msra.mxu0 0.0
      %257 = vmatprep.subr.mxu0 0.0
      %258 = vmatpush1.msra.mxu0 0.0
      %259 = vmatprep.subr.mxu0 0.0
      %260 = vmatpush1.msra.mxu0 0.0
      %261 = vmatprep.subr.mxu0 0.0
      %262 = vmatpush1.msra.mxu0 0.0
      %263 = vmatprep.subr.mxu0 0.0
      %264 = vmatpush1.msra.mxu0 0.0
      %265 = vmatprep.subr.mxu0 0.0
      %266 = vmatpush1.msra.mxu0 0.0
      %267 = vmatprep.subr.mxu0 0.0
      %268 = vmatpush1.msra.mxu0 0.0
      %269 = vmatprep.subr.mxu0 0.0
      %270 = vmatpush1.msra.mxu0 0.0
      %271 = vmatprep.subr.mxu0 0.0
      %272 = vmatpush1.msra.mxu0 0.0
      %273 = vmatprep.subr.mxu0 0.0
      %274 = vmatpush1.msra.mxu0 0.0
      %275 = vmatprep.subr.mxu0 0.0
      %276 = vmatpush1.msra.mxu0 0.0
      %277 = vmatprep.subr.mxu0 0.0
      %278 = vmatpush1.msra.mxu0 0.0
      %279 = vmatprep.subr.mxu0 0.0
      %280 = vmatpush1.msra.mxu0 0.0
      %281 = vmatprep.subr.mxu0 0.0
      %282 = vmatpush1.msra.mxu0 0.0
      %283 = vmatprep.subr.mxu0 0.0
      %284 = vmatpush1.msra.mxu0 %v251
      %285 = vmatprep.subr.mxu0 0.0
      %286 = vmatpush2.msra.mxu0 0.0
      %287 = vmatprep.subr.mxu0 0.0
      %288 = vmatpush2.msra.mxu0 0.0
      %289 = vmatprep.subr.mxu0 0.0
      %290 = vmatpush2.msra.mxu0 0.0
      %291 = vmatprep.subr.mxu0 0.0
      %292 = vmatpush2.msra.mxu0 0.0
      %293 = vmatprep.subr.mxu0 0.0
      %294 = vmatpush2.msra.mxu0 0.0
      %295 = vmatprep.subr.mxu0 0.0
      %296 = vmatpush2.msra.mxu0 0.0
      %297 = vmatprep.subr.mxu0 0.0
      %298 = vmatpush2.msra.mxu0 0.0
      %299 = vmatprep.subr.mxu0 0.0
      %300 = vmatpush2.msra.mxu0 0.0
      %301 = vmatprep.subr.mxu0 0.0
      %302 = vmatpush2.msra.mxu0 0.0
      %303 = vmatprep.subr.mxu0 0.0
      %304 = vmatpush2.msra.mxu0 0.0
      %305 = vmatprep.subr.mxu0 0.0
      %306 = vmatpush2.msra.mxu0 0.0
      %307 = vmatprep.subr.mxu0 0.0
      %308 = vmatpush2.msra.mxu0 0.0
      %309 = vmatprep.subr.mxu0 0.0
      %310 = vmatpush2.msra.mxu0 0.0
      %311 = vmatprep.subr.mxu0 0.0
      %312 = vmatpush2.msra.mxu0 0.0
      %313 = vmatprep.subr.mxu0 0.0
      %314 = vmatpush2.msra.mxu0 0.0
      %315 = vmatprep.subr.mxu0 0.0
      %316 = vmatpush2.msra.mxu0 0.0
      %317 = vmatprep.mubr.f32.mxu0 0.0
      %318 = vmatmul.mubr.f32.gmra.mxu0 %v247
      %v319 = vpop.f32.mrf.mxu0
      %v320 = vadd.f32 %v244, %v319
      %v321 = vpop.f32.mrf.mxu0
      %322 = vdwg.mxu0
      %323 = vst [vmem:[#allocation3] sm:$0x3] %v320
    $region21: #{tpu_custom_call.1} parent=1 // pred_fallthru
      _
    // Predicated region
    $region22: #{tpu_custom_call.1} parent=1 // pred_check
      _
    $region23: #{tpu_custom_call.1} parent=1 // pred_check_branch
      %325 = sbr.rel (0) target = $region25
    $region24: #{tpu_custom_call.1} parent=1 // pred_region
      %s327 = ssub.s32 32, 32
      %328 = vsyncadd [#allocation4], %s327
      %s330 = sshll.u32 [#allocation3], 4
      %s331 = int_to_ptr.vmem [resolvable:$true] %s330
      %333 = dma.vmem_to_hbm [thread:$0]  %s331, 32, %s3, [#allocation4]
    $region25: #{tpu_custom_call.1} parent=1 // pred_fallthru
      _
    // Predicated region
    $region26: #{tpu_custom_call.1} parent=1 // pred_check
      _
    $region27: #{tpu_custom_call.1} parent=1 // pred_check_branch
      %335 = sbr.rel (0) target = $region29
    $region28: #{tpu_custom_call.1} parent=1 // pred_region
      %336 = dma.done [#allocation4], 32
    $region29: #{tpu_custom_call.1} parent=1 // pred_fallthru
      _
    %337 = vsyncpa [#allocation4], 1

</llo_original>
